<compile_context>
chip_gen: v7x
topology: tpu7x:2x2x1
jax: 0.10.0
libtpu: 0.0.40
codegen_flags: <defaults>
</compile_context>

<pallas_src>
import functools

import numpy as np

import jax
import jax.numpy as jnp
from jax.experimental import pallas as pl
from jax.experimental.pallas import tpu as pltpu


def _round_up(x, m):
    return (x + m - 1) // m * m


def _sublane_multiple(dtype):
    # f32 -> 8, bf16 -> 16, int8/fp8 -> 32 (second-minor block divisibility)
    return max(8, 32 // np.dtype(dtype).itemsize)


def _const_block_spec(shape, index_map, buffer_count):
    """BlockSpec for an operand whose block never changes across the grid."""
    if buffer_count is not None:
        try:
            return pl.BlockSpec(shape, index_map,
                                pipeline_mode=pl.Buffered(buffer_count))
        except Exception:  # older jax without pipeline_mode on BlockSpec
            pass
    return pl.BlockSpec(shape, index_map)


# ----------------------------------------------------------------------------
# Pallas kernel: in-kernel im2col (6 MXU matmuls) + fused BN bias add.
# ----------------------------------------------------------------------------
def _conv3x3s2_bn_kernel(ev_ref, od_ref, ex_ref, w_ref, bias_ref, o_ref, *,
                         precision=None):
    # ev_ref  : (1, L, Cd)      even padded rows of this tile (kh = 0 taps)
    # od_ref  : (1, L, Cd)      odd padded rows of this tile  (kh = 1 taps)
    # ex_ref  : (1, 1, W1, Cd)  first even padded row below the tile (kh = 2)
    # w_ref   : (3, 2, Cd, Cp)  BN-folded weights, indexed [kh, half]
    # bias_ref: (1, Cp)         fused conv-bias + BN shift (f32)
    # o_ref   : (1, L, Cp)      output rows (width-pair index Wo is junk)
    # L = t_oh * W1, W1 = Wo + 1, Cd = 2 * Cin.
    L = ev_ref.shape[1]
    W1 = ex_ref.shape[2]

    def taps(slab, kh):
        # kw = 0, 1: aligned width pair.
        acc = jnp.dot(slab, w_ref[kh, 0],
                      preferred_element_type=jnp.float32, precision=precision)
        # kw = 2: next width pair.  The wrapped last row only ever lands in the
        # junk output column; the unwanted second half of the pair is zeroed in
        # the packed weight.
        shifted = jnp.concatenate([slab[1:], slab[:1]], axis=0)
        acc = acc + jnp.dot(shifted, w_ref[kh, 1],
                            preferred_element_type=jnp.float32,
                            precision=precision)
        return acc

    ev = ev_ref[0]
    od = od_ref[0]
    ex = ex_ref[0, 0]

    acc = taps(ev, 0)                       # kh = 0
    acc = acc + taps(od, 1)                 # kh = 1
    if L > W1:                              # kh = 2: rows shifted one out-row
        ev2 = jnp.concatenate([ev[W1:], ex], axis=0)
    else:
        ev2 = ex
    acc = acc + taps(ev2, 2)

    o_ref[0] = (acc + bias_ref[...]).astype(o_ref.dtype)


# ----------------------------------------------------------------------------
# Row-tile picker (VMEM budget, sublane rule, >= 2 grid steps when possible)
# ----------------------------------------------------------------------------
def _pick_row_tile(Ho, W1, Cd, Cp, N, in_bytes, out_bytes, sub, budget):
    cdp = _round_up(Cd, 128)

    def need(t):
        L = t * W1
        lp = _round_up(L, sub)
        slab_in = lp * cdp * in_bytes
        slab_out = lp * Cp * out_bytes
        fixed = (3 * 2 * cdp * Cp * in_bytes            # resident packed weight
                 + 2 * _round_up(W1, sub) * cdp * in_bytes  # extra-row block x2
                 + Cp * 4)                              # bias
        per_tile = (2 * 2 * slab_in                     # double-buffered ev/od
                    + 2 * slab_out                      # double-buffered output
                    + 4 * slab_in + 2 * lp * Cp * 4)    # in-kernel temporaries
        return int(1.3 * (fixed + per_tile)) + (1 << 20)

    divisors = [d for d in range(Ho, 0, -1) if Ho % d == 0]
    valid = [d for d in divisors if (d * W1) % sub == 0 or d == Ho]
    if N == 1 and len(valid) > 1:
        # prefer >= 2 grid steps so a v7x chip can use both TensorCores
        valid = [d for d in valid if d < Ho] + [d for d in valid if d == Ho]
    for t in valid:
        if need(t) <= budget:
            return t, need(t)
    t = min(valid)
    return t, need(t)


# ----------------------------------------------------------------------------
# Forward pass (NHWC core + thin NCHW wrapper matching PyTorch layout)
# ----------------------------------------------------------------------------
def stem_conv_bn_forward_nhwc(x_nhwc, params, *, compute_dtype=jnp.bfloat16,
                              out_dtype=jnp.float32, lane_multiple=128,
                              vmem_budget_bytes=20 * 1024 * 1024,
                              weight_buffer_count=1, precision=None):
    """(N, H, W, Cin) -> (N, Ho, Wo, Cout); Conv2d 3x3/s2/p1 + affine BN.

    Per-generation tuning: raise `vmem_budget_bytes` (~48 MiB) on v6e/v5e for
    larger row tiles; keep ~20-24 MiB on v7x (64 MiB physical VMEM per core).
    Set out_dtype=jnp.bfloat16 when the consumer accepts it to halve output
    HBM stores (the in-kernel accumulator stays f32 either way).
    """
    w = params["conv_w"]          # (Cout, Cin, 3, 3)  -- PyTorch layout
    b = params["conv_b"]          # (Cout,)
    gamma, beta = params["bn_gamma"], params["bn_beta"]
    mean, var, eps = params["bn_mean"], params["bn_var"], params["bn_eps"]

    N, H, W, Cin = x_nhwc.shape
    Cout = w.shape[0]
    Ho = (H - 1) // 2 + 1
    Wo = (W - 1) // 2 + 1
    W1 = Wo + 1
    Cd = 2 * Cin
    Cp = _round_up(Cout, lane_multiple)

    in_bytes = np.dtype(compute_dtype).itemsize
    out_bytes = np.dtype(out_dtype).itemsize
    sub = max(_sublane_multiple(compute_dtype), _sublane_multiple(out_dtype))
    t_oh, vmem_need = _pick_row_tile(Ho, W1, Cd, Cp, N, in_bytes, out_bytes,
                                     sub, vmem_budget_bytes)
    n_tiles = Ho // t_oh
    L = t_oh * W1

    # ---- wrapper-side prep: ~2 activation passes, no im2col -----------------
    x_c = x_nhwc.astype(compute_dtype)
    x_pad = jnp.pad(x_c, ((0, 0), (1, 2 * Ho + 1 - H),
                          (1, 2 * Wo + 1 - W), (0, 0)))
    ev_q = x_pad[:, 0::2].reshape(N, Ho + 1, W1, Cd)   # padded rows 0,2,...,2Ho
    od_q = x_pad[:, 1::2].reshape(N, Ho + 1, W1, Cd)   # padded rows 1,3,...
    ev_main = ev_q[:, :Ho].reshape(N, Ho * W1, Cd)
    od_main = od_q[:, :Ho].reshape(N, Ho * W1, Cd)
    ex_rows = ev_q[:, t_oh::t_oh]                      # (N, n_tiles, W1, Cd)

    # ---- fold conv bias + inference BN into the weight / one bias vector ----
    bn_scale = gamma / jnp.sqrt(var + eps)                       # (Cout,)
    w_t = jnp.transpose(w, (2, 3, 1, 0)) * bn_scale              # (3,3,Cin,Cout)
    w_a = w_t[:, 0:2].reshape(3, Cd, Cout)                       # kw = 0, 1
    w_b = jnp.concatenate(                                       # kw = 2 (+0)
        [w_t[:, 2], jnp.zeros((3, Cin, Cout), w_t.dtype)], axis=1)
    w_packed = jnp.stack([w_a, w_b], axis=1)                     # (3,2,Cd,Cout)
    w_packed = jnp.pad(
        w_packed, ((0, 0), (0, 0), (0, 0), (0, Cp - Cout))).astype(compute_dtype)
    fused_bias = jnp.pad(beta + (b - mean) * bn_scale,
                         (0, Cp - Cout)).reshape(1, Cp).astype(jnp.float32)

    # ---- pallas_call ---------------------------------------------------------
    ev_spec = pl.BlockSpec((1, L, Cd), lambda n, i: (n, i, 0))
    od_spec = pl.BlockSpec((1, L, Cd), lambda n, i: (n, i, 0))
    ex_spec = pl.BlockSpec((1, 1, W1, Cd), lambda n, i: (n, i, 0, 0))
    w_spec = _const_block_spec((3, 2, Cd, Cp), lambda n, i: (0, 0, 0, 0),
                               weight_buffer_count)
    bias_spec = _const_block_spec((1, Cp), lambda n, i: (0, 0),
                                  weight_buffer_count)
    o_spec = pl.BlockSpec((1, L, Cp), lambda n, i: (n, i, 0))

    vmem_limit = int(max(vmem_need + (8 << 20), 16 << 20))
    out = pl.pallas_call(
        functools.partial(_conv3x3s2_bn_kernel, precision=precision),
        out_shape=jax.ShapeDtypeStruct((N, Ho * W1, Cp), out_dtype),
        grid_spec=pltpu.PrefetchScalarGridSpec(
            num_scalar_prefetch=0,
            grid=(N, n_tiles),
            in_specs=[ev_spec, od_spec, ex_spec, w_spec, bias_spec],
            out_specs=o_spec),
        compiler_params=pltpu.CompilerParams(
            dimension_semantics=("parallel", "parallel"),
            vmem_limit_bytes=vmem_limit),
    )(ev_main, od_main, ex_rows, w_packed, fused_bias)

    return out.reshape(N, Ho, W1, Cp)[:, :, :Wo, :Cout]


def stem_conv_bn_forward(x_nchw, params, **kwargs):
    """PyTorch-layout wrapper: (N, Cin, H, W) -> (N, Cout, Ho, Wo).

    The NCHW<->NHWC transposes exist only to match the PyTorch interface;
    NHWC neighbours should call stem_conv_bn_forward_nhwc directly.
    """
    x = jnp.transpose(x_nchw, (0, 2, 3, 1))
    y = stem_conv_bn_forward_nhwc(x, params, **kwargs)
    return jnp.transpose(y, (0, 3, 1, 2))


# ----------------------------------------------------------------------------
# Deterministic parameter construction (synthetic init, no checkpoint)
# ----------------------------------------------------------------------------
def make_params(in_channels, out_channels, key):
    k_w, k_b, k_g, k_beta = jax.random.split(key, 4)
    return {
        "conv_w": 0.1 * jax.random.normal(
            k_w, (out_channels, in_channels, 3, 3), jnp.float32),
        "conv_b": 0.05 * jax.random.normal(k_b, (out_channels,), jnp.float32),
        "bn_gamma": 1.0 + 0.1 * jax.random.normal(k_g, (out_channels,),
                                                  jnp.float32),
        "bn_beta": 0.1 * jax.random.normal(k_beta, (out_channels,),
                                           jnp.float32),
        "bn_mean": jnp.zeros((out_channels,), jnp.float32),
        "bn_var": jnp.ones((out_channels,), jnp.float32),
        "bn_eps": 1e-5,
    }


# ----------------------------------------------------------------------------
# Pure-JAX reference for correctness check
# ----------------------------------------------------------------------------
def reference_forward(x_nchw, params):
    w, b = params["conv_w"], params["conv_b"]
    y = jax.lax.conv_general_dilated(
        x_nchw, w, window_strides=(2, 2), padding=((1, 1), (1, 1)),
        dimension_numbers=("NCHW", "OIHW", "NCHW"))
    y = y + b.reshape(1, -1, 1, 1)
    scale = params["bn_gamma"] / jnp.sqrt(params["bn_var"] + params["bn_eps"])
    y = (y - params["bn_mean"].reshape(1, -1, 1, 1)) * scale.reshape(1, -1, 1, 1)
    return y + params["bn_beta"].reshape(1, -1, 1, 1)


if __name__ == "__main__":
    key = jax.random.PRNGKey(0)
    k_x, k_p = jax.random.split(key)

    N, Cin, H, W = 2, 4, 16, 16
    Cout = 8

    x = jax.random.normal(k_x, (N, Cin, H, W), jnp.float32)
    params = make_params(Cin, Cout, k_p)

    ref = jax.block_until_ready(reference_forward(x, params))

    # Exact-math path: f32 operands must match the XLA conv reference tightly.
    # (Review note: for very large K consider precision=lax.Precision.HIGHEST.)
    out_f32 = jax.block_until_ready(
        stem_conv_bn_forward(x, params, compute_dtype=jnp.float32))
    assert out_f32.shape == (N, Cout, H // 2, W // 2), out_f32.shape
    err_f32 = float(jnp.max(jnp.abs(out_f32 - ref)))
    assert jnp.allclose(out_f32, ref, atol=1e-4, rtol=1e-4), err_f32

    # Fast path: bf16 operands on the MXU with f32 accumulation.  Tolerance
    # covers only bf16 input/weight quantization.
    out_bf = jax.block_until_ready(stem_conv_bn_forward(x, params))
    assert out_bf.shape == (N, Cout, H // 2, W // 2), out_bf.shape
    err_bf = float(jnp.max(jnp.abs(out_bf - ref)))
    assert jnp.allclose(out_bf, ref, atol=5e-2, rtol=5e-2), err_bf

    # bf16-output variant (halves output HBM stores for bf16 consumers).
    out_lp = jax.block_until_ready(
        stem_conv_bn_forward(x, params, out_dtype=jnp.bfloat16))
    assert out_lp.dtype == jnp.bfloat16
    err_lp = float(jnp.max(jnp.abs(out_lp.astype(jnp.float32) - ref)))
    assert jnp.allclose(out_lp.astype(jnp.float32), ref,
                        atol=7e-2, rtol=7e-2), err_lp

    print("KERNEL_OK")
</pallas_src>

<mosaic_0001>
module attributes {stable_mosaic.version = 11 : i64} {
  func.func @_conv3x3s2_bn_kernel(%arg0: i32, %arg1: i32, %arg2: memref<1x72x8xf32, #tpu.memory_space<vmem>>, %arg3: memref<1x72x8xf32, #tpu.memory_space<vmem>>, %arg4: memref<1x1x9x8xf32, #tpu.memory_space<vmem>>, %arg5: memref<3x2x8x128xf32, #tpu.memory_space<vmem>>, %arg6: memref<1x128xf32, #tpu.memory_space<vmem>>, %arg7: memref<1x72x128xf32, #tpu.memory_space<vmem>>) attributes {dimension_semantics = [#tpu.dimension_semantics<parallel>, #tpu.dimension_semantics<parallel>], iteration_bounds = array<i64: 2, 1>, scalar_prefetch = 0 : i64, scratch_operands = 0 : i64, tpu.core_type = #tpu.core_type<tc>, window_params = [{transform_indices = @transform_0, window_bounds = array<i64: 1, 72, 8>}, {transform_indices = @transform_1, window_bounds = array<i64: 1, 72, 8>}, {transform_indices = @transform_2, window_bounds = array<i64: 1, 1, 9, 8>}, {pipeline_mode = #tpu.pipeline_mode<synchronous>, transform_indices = @transform_3, window_bounds = array<i64: 3, 2, 8, 128>}, {pipeline_mode = #tpu.pipeline_mode<synchronous>, transform_indices = @transform_4, window_bounds = array<i64: 1, 128>}, {transform_indices = @transform_5, window_bounds = array<i64: 1, 72, 128>}]} {
    %c0 = arith.constant 0 : index
    %c0_0 = arith.constant 0 : index
    %c0_1 = arith.constant 0 : index
    %0 = vector.load %arg2[%c0, %c0_0, %c0_1] : memref<1x72x8xf32, #tpu.memory_space<vmem>>, vector<1x72x8xf32>
    %1 = vector.shape_cast %0 : vector<1x72x8xf32> to vector<72x8xf32>
    %c0_2 = arith.constant 0 : index
    %c0_3 = arith.constant 0 : index
    %c0_4 = arith.constant 0 : index
    %2 = vector.load %arg3[%c0_2, %c0_3, %c0_4] : memref<1x72x8xf32, #tpu.memory_space<vmem>>, vector<1x72x8xf32>
    %3 = vector.shape_cast %2 : vector<1x72x8xf32> to vector<72x8xf32>
    %c0_5 = arith.constant 0 : index
    %c0_6 = arith.constant 0 : index
    %c0_7 = arith.constant 0 : index
    %c0_8 = arith.constant 0 : index
    %4 = vector.load %arg4[%c0_5, %c0_6, %c0_7, %c0_8] : memref<1x1x9x8xf32, #tpu.memory_space<vmem>>, vector<1x1x9x8xf32>
    %5 = vector.shape_cast %4 : vector<1x1x9x8xf32> to vector<9x8xf32>
    %c0_9 = arith.constant 0 : index
    %c0_10 = arith.constant 0 : index
    %c0_11 = arith.constant 0 : index
    %c0_12 = arith.constant 0 : index
    %6 = vector.load %arg5[%c0_9, %c0_10, %c0_11, %c0_12] : memref<3x2x8x128xf32, #tpu.memory_space<vmem>>, vector<1x1x8x128xf32>
    %7 = vector.shape_cast %6 : vector<1x1x8x128xf32> to vector<8x128xf32>
    %cst = arith.constant dense<0.000000e+00> : vector<72x128xf32>
    %8 = tpu.matmul %1, %7, %cst {dimension_numbers = #tpu.dot_dimension_numbers<[1], [0], [0], [1], [0, 0, 1, 1], [], []>} : vector<72x8xf32>, vector<8x128xf32>, vector<72x128xf32> -> vector<72x128xf32>
    %9 = vector.extract_strided_slice %1 {offsets = [1, 0], sizes = [71, 8], strides = [1, 1]} : vector<72x8xf32> to vector<71x8xf32>
    %10 = vector.extract_strided_slice %1 {offsets = [0, 0], sizes = [1, 8], strides = [1, 1]} : vector<72x8xf32> to vector<1x8xf32>
    %11 = tpu.concatenate %9, %10 in 0 : vector<71x8xf32>, vector<1x8xf32> -> vector<72x8xf32>
    %c0_13 = arith.constant 0 : index
    %c1 = arith.constant 1 : index
    %c0_14 = arith.constant 0 : index
    %c0_15 = arith.constant 0 : index
    %12 = vector.load %arg5[%c0_13, %c1, %c0_14, %c0_15] : memref<3x2x8x128xf32, #tpu.memory_space<vmem>>, vector<1x1x8x128xf32>
    %13 = vector.shape_cast %12 : vector<1x1x8x128xf32> to vector<8x128xf32>
    %cst_16 = arith.constant dense<0.000000e+00> : vector<72x128xf32>
    %14 = tpu.matmul %11, %13, %cst_16 {dimension_numbers = #tpu.dot_dimension_numbers<[1], [0], [0], [1], [0, 0, 1, 1], [], []>} : vector<72x8xf32>, vector<8x128xf32>, vector<72x128xf32> -> vector<72x128xf32>
    %15 = arith.addf %8, %14 : vector<72x128xf32>
    %c1_17 = arith.constant 1 : index
    %c0_18 = arith.constant 0 : index
    %c0_19 = arith.constant 0 : index
    %c0_20 = arith.constant 0 : index
    %16 = vector.load %arg5[%c1_17, %c0_18, %c0_19, %c0_20] : memref<3x2x8x128xf32, #tpu.memory_space<vmem>>, vector<1x1x8x128xf32>
    %17 = vector.shape_cast %16 : vector<1x1x8x128xf32> to vector<8x128xf32>
    %cst_21 = arith.constant dense<0.000000e+00> : vector<72x128xf32>
    %18 = tpu.matmul %3, %17, %cst_21 {dimension_numbers = #tpu.dot_dimension_numbers<[1], [0], [0], [1], [0, 0, 1, 1], [], []>} : vector<72x8xf32>, vector<8x128xf32>, vector<72x128xf32> -> vector<72x128xf32>
    %19 = vector.extract_strided_slice %3 {offsets = [1, 0], sizes = [71, 8], strides = [1, 1]} : vector<72x8xf32> to vector<71x8xf32>
    %20 = vector.extract_strided_slice %3 {offsets = [0, 0], sizes = [1, 8], strides = [1, 1]} : vector<72x8xf32> to vector<1x8xf32>
    %21 = tpu.concatenate %19, %20 in 0 : vector<71x8xf32>, vector<1x8xf32> -> vector<72x8xf32>
    %c1_22 = arith.constant 1 : index
    %c1_23 = arith.constant 1 : index
    %c0_24 = arith.constant 0 : index
    %c0_25 = arith.constant 0 : index
    %22 = vector.load %arg5[%c1_22, %c1_23, %c0_24, %c0_25] : memref<3x2x8x128xf32, #tpu.memory_space<vmem>>, vector<1x1x8x128xf32>
    %23 = vector.shape_cast %22 : vector<1x1x8x128xf32> to vector<8x128xf32>
    %cst_26 = arith.constant dense<0.000000e+00> : vector<72x128xf32>
    %24 = tpu.matmul %21, %23, %cst_26 {dimension_numbers = #tpu.dot_dimension_numbers<[1], [0], [0], [1], [0, 0, 1, 1], [], []>} : vector<72x8xf32>, vector<8x128xf32>, vector<72x128xf32> -> vector<72x128xf32>
    %25 = arith.addf %18, %24 : vector<72x128xf32>
    %26 = arith.addf %15, %25 : vector<72x128xf32>
    %27 = vector.extract_strided_slice %1 {offsets = [9, 0], sizes = [63, 8], strides = [1, 1]} : vector<72x8xf32> to vector<63x8xf32>
    %28 = tpu.concatenate %27, %5 in 0 : vector<63x8xf32>, vector<9x8xf32> -> vector<72x8xf32>
    %c2 = arith.constant 2 : index
    %c0_27 = arith.constant 0 : index
    %c0_28 = arith.constant 0 : index
    %c0_29 = arith.constant 0 : index
    %29 = vector.load %arg5[%c2, %c0_27, %c0_28, %c0_29] : memref<3x2x8x128xf32, #tpu.memory_space<vmem>>, vector<1x1x8x128xf32>
    %30 = vector.shape_cast %29 : vector<1x1x8x128xf32> to vector<8x128xf32>
    %cst_30 = arith.constant dense<0.000000e+00> : vector<72x128xf32>
    %31 = tpu.matmul %28, %30, %cst_30 {dimension_numbers = #tpu.dot_dimension_numbers<[1], [0], [0], [1], [0, 0, 1, 1], [], []>} : vector<72x8xf32>, vector<8x128xf32>, vector<72x128xf32> -> vector<72x128xf32>
    %32 = vector.extract_strided_slice %28 {offsets = [1, 0], sizes = [71, 8], strides = [1, 1]} : vector<72x8xf32> to vector<71x8xf32>
    %33 = vector.extract_strided_slice %28 {offsets = [0, 0], sizes = [1, 8], strides = [1, 1]} : vector<72x8xf32> to vector<1x8xf32>
    %34 = tpu.concatenate %32, %33 in 0 : vector<71x8xf32>, vector<1x8xf32> -> vector<72x8xf32>
    %c2_31 = arith.constant 2 : index
    %c1_32 = arith.constant 1 : index
    %c0_33 = arith.constant 0 : index
    %c0_34 = arith.constant 0 : index
    %35 = vector.load %arg5[%c2_31, %c1_32, %c0_33, %c0_34] : memref<3x2x8x128xf32, #tpu.memory_space<vmem>>, vector<1x1x8x128xf32>
    %36 = vector.shape_cast %35 : vector<1x1x8x128xf32> to vector<8x128xf32>
    %cst_35 = arith.constant dense<0.000000e+00> : vector<72x128xf32>
    %37 = tpu.matmul %34, %36, %cst_35 {dimension_numbers = #tpu.dot_dimension_numbers<[1], [0], [0], [1], [0, 0, 1, 1], [], []>} : vector<72x8xf32>, vector<8x128xf32>, vector<72x128xf32> -> vector<72x128xf32>
    %38 = arith.addf %31, %37 : vector<72x128xf32>
    %39 = arith.addf %26, %38 : vector<72x128xf32>
    %c0_36 = arith.constant 0 : index
    %c0_37 = arith.constant 0 : index
    %40 = vector.load %arg6[%c0_36, %c0_37] : memref<1x128xf32, #tpu.memory_space<vmem>>, vector<1x128xf32>
    %41 = vector.broadcast %40 : vector<1x128xf32> to vector<72x128xf32>
    %42 = arith.addf %39, %41 : vector<72x128xf32>
    %c0_38 = arith.constant 0 : index
    %c0_39 = arith.constant 0 : index
    %c0_40 = arith.constant 0 : index
    %43 = vector.load %arg7[%c0_38, %c0_39, %c0_40] : memref<1x72x128xf32, #tpu.memory_space<vmem>>, vector<1x72x128xf32>
    %44 = vector.shape_cast %43 : vector<1x72x128xf32> to vector<72x128xf32>
    %45 = vector.shape_cast %42 : vector<72x128xf32> to vector<1x72x128xf32>
    tpu.vector_store %arg7[%c0_38, %c0_39, %c0_40], %45 {strides = array<i32>} : memref<1x72x128xf32, #tpu.memory_space<vmem>>, vector<1x72x128xf32>,
    return
  }
  func.func @transform_0(%arg0: i32, %arg1: i32) -> (i32, i32, i32) {
    %c0_i32 = arith.constant 0 : i32
    %c0_i32_0 = arith.constant 0 : i32
    return %arg0, %arg1, %c0_i32 : i32, i32, i32
  }
  func.func @transform_1(%arg0: i32, %arg1: i32) -> (i32, i32, i32) {
    %c0_i32 = arith.constant 0 : i32
    %c0_i32_0 = arith.constant 0 : i32
    return %arg0, %arg1, %c0_i32 : i32, i32, i32
  }
  func.func @transform_2(%arg0: i32, %arg1: i32) -> (i32, i32, i32, i32) {
    %c0_i32 = arith.constant 0 : i32
    %c0_i32_0 = arith.constant 0 : i32
    %c0_i32_1 = arith.constant 0 : i32
    return %arg0, %arg1, %c0_i32, %c0_i32_0 : i32, i32, i32, i32
  }
  func.func @transform_3(%arg0: i32, %arg1: i32) -> (i32, i32, i32, i32) {
    %c0_i32 = arith.constant 0 : i32
    %c0_i32_0 = arith.constant 0 : i32
    %c0_i32_1 = arith.constant 0 : i32
    %c0_i32_2 = arith.constant 0 : i32
    %c0_i32_3 = arith.constant 0 : i32
    return %c0_i32, %c0_i32_0, %c0_i32_1, %c0_i32_2 : i32, i32, i32, i32
  }
  func.func @transform_4(%arg0: i32, %arg1: i32) -> (i32, i32) {
    %c0_i32 = arith.constant 0 : i32
    %c0_i32_0 = arith.constant 0 : i32
    %c0_i32_1 = arith.constant 0 : i32
    return %c0_i32, %c0_i32_0 : i32, i32
  }
  func.func @transform_5(%arg0: i32, %arg1: i32) -> (i32, i32, i32) {
    %c0_i32 = arith.constant 0 : i32
    %c0_i32_0 = arith.constant 0 : i32
    return %arg0, %arg1, %c0_i32 : i32, i32, i32
  }
}

</mosaic_0001>

<llo_original>
// kernel: tpu_custom_call.1
$region0: #{tpu_custom_call.1}
  #allocation0 [shape = 'u32[]', space=smem, size = 0x4, offset = 0x4, fixed_abs, tag = 'smem constant byte address 0x4 - core index']
  #allocation1 [shape = 'u32[144,128]{1,0:T(1,128)}', space=vmem, size = 0x12000, scoped, tag = 'internal scratch']
  %s0 = inlined_call_operand.vmem [shape: f32[2,72,8], index: 0, kind: input, shape index: {}]
  %s1 = inlined_call_operand.vmem [shape: f32[2,72,8], index: 1, kind: input, shape index: {}]
  %s2 = inlined_call_operand.vmem [shape: f32[2,1,9,8], index: 2, kind: input, shape index: {}]
  %s3 = inlined_call_operand.vmem [shape: f32[3,2,8,128], index: 3, kind: input, shape index: {}]
  %s4 = inlined_call_operand.vmem [shape: f32[1,128], index: 4, kind: input, shape index: {}]
  %s5 = inlined_call_operand.hbm [shape: f32[2,72,128], index: 5, kind: output, shape index: {}]
  %s6 = sld [smem:[#allocation0]]
  $region53: #{tpu_custom_call.1} parent=0
    _
  %s8 = ssub.s32 1, %s6
  %s9 = scalar_select 0, %s8, %s6
  $region1: #{tpu_custom_call.1} parent=0
    #allocation2 [shape = 'u8[73728]{0}', space=vmem, size = 0x12000, scoped, tag = 'output window, operand 0']
    #allocation3 [shape = 's32[2]{0}', space=sflag, size = 0x8, scoped, tag = 'scoped memory for tpu_custom_call.1']
    %10 = vsyncpa [#allocation3], 0
    %s11 = scalar_lea.sflag [#allocation3], 1
    %12 = vsyncpa %s11, 0
    loop: start=0, step=1, limit=4
    $region2: #{tpu_custom_call.1} parent=1 // loop_pre_header
      _
    $region3: #{tpu_custom_call.1} parent=1 // loop_header
      %s14 = sphi 0, %s18
      %p15 = scmp.ge.s32.totalorder %s14, 4
      %s21 = sphi 0, %s33
      %s22 = sphi 0, %s29
      %s23 = sphi 0, %s21
      %s24 = sphi 0, %s22
      %s25 = sphi 0, %s23
      %s26 = sphi 0, %s24
      %s38 = sphi 0, %s40
      %s41 = sphi 0, %s38
      %s42 = sphi 0, %s41
      %s58 = sphi 0, %s42
      %s66 = sphi 0, %s68
      %s69 = sphi 0, %s66
      %s70 = sphi 0, %s69
      %s86 = sphi 0, %s70
      %s94 = sphi 0, %s96
      %s97 = sphi 0, %s94
      %s98 = sphi 0, %s97
      %s114 = sphi 0, %s98
      %s118 = sphi 0, %s118
      %s120 = sphi 0, %s118
      %s121 = sphi 0, %s120
      %s135 = sphi 0, %s121
      %s139 = sphi 0, %s139
      %s141 = sphi 0, %s139
      %s142 = sphi 0, %s141
      %s156 = sphi 0, %s142
      %s164 = sphi 0, %s166
      %s167 = sphi 0, %s164
      %s168 = sphi 0, %s167
      %s184 = sphi 0, %s168
    $region4: #{tpu_custom_call.1} parent=1 // loop_header_branch
      %17 = sbr.rel (%p15) target = $region8
    $region5: #{tpu_custom_call.1} parent=1 // loop_body
      %s19 = ssub.s32 %s14, 1
      %s20 = ssub.s32 %s14, 2
      %s27 = sadd.s32 1, %s22
      %p28 = scmp.ge.s32.totalorder %s27, 1
      %s29 = scalar_select %p28, 0, %s27
      %s30 = sadd.s32 1, %s21
      %s31 = scalar_select %p28, %s30, %s21
      %p32 = scmp.ge.s32.totalorder %s31, 2
      %s33 = scalar_select %p32, 0, %s31
      %s34 = ssub.s32 %s21, %s33
      %s35 = ssub.s32 %s22, %s29
      %s36 = sor.u32 %s34, %s35
      %p37 = scmp.eq.s32.totalorder %s36, 0
      %s39 = sadd.s32 %s38, 1
      %s40 = scalar_select %p37, %s38, %s39
      %p43 = pneg %p37
      %p44 = scmp.eq.s32.totalorder %s14, 1
      %p45 = por %p43, %p44
      %p46 = scmp.ne.s32.totalorder %s38, %s41
      %p47 = scmp.eq.s32.totalorder %s14, 0
      %p48 = por %p46, %p47
      %p49 = scmp.ne.s32.totalorder %s38, %s41
      %p50 = scmp.eq.s32.totalorder %s19, 1
      %p51 = por %p49, %p50
      %p52 = scmp.ne.s32.totalorder %s41, %s42
      %p53 = scmp.eq.s32.totalorder %s19, 0
      %p54 = por %p52, %p53
      %p55 = scmp.ne.s32.totalorder %s41, %s42
      %p56 = scmp.eq.s32.totalorder %s20, 1
      %p57 = por %p55, %p56
      %p59 = scmp.ne.s32.totalorder %s42, %s58
      %p60 = scmp.eq.s32.totalorder %s20, 0
      %p61 = por %p59, %p60
      %s62 = ssub.s32 %s21, %s33
      %s63 = ssub.s32 %s22, %s29
      %s64 = sor.u32 %s62, %s63
      %p65 = scmp.eq.s32.totalorder %s64, 0
      %s67 = sadd.s32 %s66, 1
      %s68 = scalar_select %p65, %s66, %s67
      %p71 = pneg %p65
      %p72 = scmp.eq.s32.totalorder %s14, 1
      %p73 = por %p71, %p72
      %p74 = scmp.ne.s32.totalorder %s66, %s69
      %p75 = scmp.eq.s32.totalorder %s14, 0
      %p76 = por %p74, %p75
      %p77 = scmp.ne.s32.totalorder %s66, %s69
      %p78 = scmp.eq.s32.totalorder %s19, 1
      %p79 = por %p77, %p78
      %p80 = scmp.ne.s32.totalorder %s69, %s70
      %p81 = scmp.eq.s32.totalorder %s19, 0
      %p82 = por %p80, %p81
      %p83 = scmp.ne.s32.totalorder %s69, %s70
      %p84 = scmp.eq.s32.totalorder %s20, 1
      %p85 = por %p83, %p84
      %p87 = scmp.ne.s32.totalorder %s70, %s86
      %p88 = scmp.eq.s32.totalorder %s20, 0
      %p89 = por %p87, %p88
      %s90 = ssub.s32 %s21, %s33
      %s91 = ssub.s32 %s22, %s29
      %s92 = sor.u32 %s90, %s91
      %p93 = scmp.eq.s32.totalorder %s92, 0
      %s95 = sadd.s32 %s94, 1
      %s96 = scalar_select %p93, %s94, %s95
      %p99 = pneg %p93
      %p100 = scmp.eq.s32.totalorder %s14, 1
      %p101 = por %p99, %p100
      %p102 = scmp.ne.s32.totalorder %s94, %s97
      %p103 = scmp.eq.s32.totalorder %s14, 0
      %p104 = por %p102, %p103
      %p105 = scmp.ne.s32.totalorder %s94, %s97
      %p106 = scmp.eq.s32.totalorder %s19, 1
      %p107 = por %p105, %p106
      %p108 = scmp.ne.s32.totalorder %s97, %s98
      %p109 = scmp.eq.s32.totalorder %s19, 0
      %p110 = por %p108, %p109
      %p111 = scmp.ne.s32.totalorder %s97, %s98
      %p112 = scmp.eq.s32.totalorder %s20, 1
      %p113 = por %p111, %p112
      %p115 = scmp.ne.s32.totalorder %s98, %s114
      %p116 = scmp.eq.s32.totalorder %s20, 0
      %p117 = por %p115, %p116
      %s119 = sadd.s32 %s118, 1
      %p122 = scmp.eq.s32.totalorder %s14, 1
      %p123 = scmp.ne.s32.totalorder %s118, %s120
      %p124 = scmp.eq.s32.totalorder %s14, 0
      %p125 = por %p123, %p124
      %p126 = scmp.ne.s32.totalorder %s118, %s120
      %p127 = scmp.eq.s32.totalorder %s19, 1
      %p128 = por %p126, %p127
      %p129 = scmp.ne.s32.totalorder %s120, %s121
      %p130 = scmp.eq.s32.totalorder %s19, 0
      %p131 = por %p129, %p130
      %p132 = scmp.ne.s32.totalorder %s120, %s121
      %p133 = scmp.eq.s32.totalorder %s20, 1
      %p134 = por %p132, %p133
      %p136 = scmp.ne.s32.totalorder %s121, %s135
      %p137 = scmp.eq.s32.totalorder %s20, 0
      %p138 = por %p136, %p137
      %s140 = sadd.s32 %s139, 1
      %p143 = scmp.eq.s32.totalorder %s14, 1
      %p144 = scmp.ne.s32.totalorder %s139, %s141
      %p145 = scmp.eq.s32.totalorder %s14, 0
      %p146 = por %p144, %p145
      %p147 = scmp.ne.s32.totalorder %s139, %s141
      %p148 = scmp.eq.s32.totalorder %s19, 1
      %p149 = por %p147, %p148
      %p150 = scmp.ne.s32.totalorder %s141, %s142
      %p151 = scmp.eq.s32.totalorder %s19, 0
      %p152 = por %p150, %p151
      %p153 = scmp.ne.s32.totalorder %s141, %s142
      %p154 = scmp.eq.s32.totalorder %s20, 1
      %p155 = por %p153, %p154
      %p157 = scmp.ne.s32.totalorder %s142, %s156
      %p158 = scmp.eq.s32.totalorder %s20, 0
      %p159 = por %p157, %p158
      %s160 = ssub.s32 %s21, %s33
      %s161 = ssub.s32 %s22, %s29
      %s162 = sor.u32 %s160, %s161
      %p163 = scmp.eq.s32.totalorder %s162, 0
      %s165 = sadd.s32 %s164, 1
      %s166 = scalar_select %p163, %s164, %s165
      %p169 = pneg %p163
      %p170 = scmp.eq.s32.totalorder %s14, 1
      %p171 = por %p169, %p170
      %p172 = scmp.ne.s32.totalorder %s164, %s167
      %p173 = scmp.eq.s32.totalorder %s14, 0
      %p174 = por %p172, %p173
      %p175 = scmp.ne.s32.totalorder %s164, %s167
      %p176 = scmp.eq.s32.totalorder %s19, 1
      %p177 = por %p175, %p176
      %p178 = scmp.ne.s32.totalorder %s167, %s168
      %p179 = scmp.eq.s32.totalorder %s19, 0
      %p180 = por %p178, %p179
      %p181 = scmp.ne.s32.totalorder %s167, %s168
      %p182 = scmp.eq.s32.totalorder %s20, 1
      %p183 = por %p181, %p182
      %p185 = scmp.ne.s32.totalorder %s168, %s184
      %p186 = scmp.eq.s32.totalorder %s20, 0
      %p187 = por %p185, %p186
      %p188 = scmp.le.s32.totalorder 1, %s14
      %p189 = scmp.lt.s32.totalorder %s14, 3
      %p190 = pnand %p188, %p189
      %p191 = pneg %p190
      // Predicated region
      $region9: #{tpu_custom_call.1} parent=5 // pred_check
        _
      $region10: #{tpu_custom_call.1} parent=5 // pred_check_branch
        %193 = sbr.rel (%p190) target = $region12
      $region11: #{tpu_custom_call.1} parent=5 // pred_region
        %s194 = ssub.s32 %s14, 1
        // Predicated region
        $region13: #{tpu_custom_call.1} parent=11 // pred_check
          %p195 = pneg %p131
        $region14: #{tpu_custom_call.1} parent=11 // pred_check_branch
          %197 = sbr.rel (%p195) target = $region16
        $region15: #{tpu_custom_call.1} parent=11 // pred_region
          _
        $region16: #{tpu_custom_call.1} parent=11 // pred_fallthru
          _
        // Predicated region
        $region17: #{tpu_custom_call.1} parent=11 // pred_check
          %p198 = pneg %p152
        $region18: #{tpu_custom_call.1} parent=11 // pred_check_branch
          %200 = sbr.rel (%p198) target = $region20
        $region19: #{tpu_custom_call.1} parent=11 // pred_region
          _
        $region20: #{tpu_custom_call.1} parent=11 // pred_fallthru
          _
      $region12: #{tpu_custom_call.1} parent=5 // pred_fallthru
        _
      %p201 = scmp.lt.s32.totalorder %s14, 2
      // Predicated region
      $region21: #{tpu_custom_call.1} parent=5 // pred_check
        %p202 = pneg %p201
      $region22: #{tpu_custom_call.1} parent=5 // pred_check_branch
        %204 = sbr.rel (%p202) target = $region24
      $region23: #{tpu_custom_call.1} parent=5 // pred_region
        // Predicated region
        $region25: #{tpu_custom_call.1} parent=23 // pred_check
          %p205 = pneg %p48
        $region26: #{tpu_custom_call.1} parent=23 // pred_check_branch
          %207 = sbr.rel (%p205) target = $region28
        $region27: #{tpu_custom_call.1} parent=23 // pred_region
          %s208 = smul.u32 9, %s22
          %p209 = scmp.lt.s32.totalorder %s21, 1
          %s210 = scalar_select %p209, %s21, 1
          %p211 = scmp.lt.s32.totalorder %s208, 8
          %s212 = scalar_select %p211, %s208, 8
          %s213 = smul.addr %s210, 9
          %s214 = sadd.s32 %s212, %s213
          %s215 = smul.addr %s214, 8
          %s216 = scalar_lea.vmem %s0, %s215
          %s217 = smul.u32 9, %s22
        $region28: #{tpu_custom_call.1} parent=23 // pred_fallthru
          _
        // Predicated region
        $region29: #{tpu_custom_call.1} parent=23 // pred_check
          %p218 = pneg %p76
        $region30: #{tpu_custom_call.1} parent=23 // pred_check_branch
          %220 = sbr.rel (%p218) target = $region32
        $region31: #{tpu_custom_call.1} parent=23 // pred_region
          %s221 = smul.u32 9, %s22
          %p222 = scmp.lt.s32.totalorder %s21, 1
          %s223 = scalar_select %p222, %s21, 1
          %p224 = scmp.lt.s32.totalorder %s221, 8
          %s225 = scalar_select %p224, %s221, 8
          %s226 = smul.addr %s223, 9
          %s227 = sadd.s32 %s225, %s226
          %s228 = smul.addr %s227, 8
          %s229 = scalar_lea.vmem %s1, %s228
          %s230 = smul.u32 9, %s22
        $region32: #{tpu_custom_call.1} parent=23 // pred_fallthru
          _
        // Predicated region
        $region33: #{tpu_custom_call.1} parent=23 // pred_check
          %p231 = pneg %p104
        $region34: #{tpu_custom_call.1} parent=23 // pred_check_branch
          %233 = sbr.rel (%p231) target = $region36
        $region35: #{tpu_custom_call.1} parent=23 // pred_region
          %p234 = scmp.lt.s32.totalorder %s21, 1
          %s235 = scalar_select %p234, %s21, 1
          %p236 = scmp.lt.s32.totalorder %s22, 0
          %s237 = scalar_select %p236, %s22, 0
          %s238 = smul.addr %s237, 2
          %s239 = smul.addr %s235, 2
          %s240 = sadd.s32 %s238, %s239
          %s241 = smul.addr %s240, 8
          %s242 = scalar_lea.vmem %s2, %s241
        $region36: #{tpu_custom_call.1} parent=23 // pred_fallthru
          _
      $region24: #{tpu_custom_call.1} parent=5 // pred_fallthru
        _
      %p243 = scmp.le.s32.totalorder 1, %s14
      %p244 = scmp.lt.s32.totalorder %s14, 3
      %p245 = pnand %p243, %p244
      %p246 = pneg %p245
      // Predicated region
      $region37: #{tpu_custom_call.1} parent=5 // pred_check
        _
      $region38: #{tpu_custom_call.1} parent=5 // pred_check_branch
        %248 = sbr.rel (%p245) target = $region40
      $region39: #{tpu_custom_call.1} parent=5 // pred_region
        %s249 = ssub.s32 %s14, 1
        %s250 = smul.u32 9, %s24
        %p251 = scmp.lt.s32.totalorder %s23, 1
        %s252 = scalar_select %p251, %s23, 1
        %p253 = scmp.lt.s32.totalorder %s250, 8
        %s254 = scalar_select %p253, %s250, 8
        %s255 = smul.addr %s252, 9
        %s256 = sadd.s32 %s254, %s255
        %s257 = smul.addr %s256, 8
        %s258 = scalar_lea.vmem %s0, %s257
        %p259 = pneg %p54
        %p260 = pneg %p51
        %s261 = smul.u32 9, %s24
        %p262 = scmp.lt.s32.totalorder %s23, 1
        %s263 = scalar_select %p262, %s23, 1
        %p264 = scmp.lt.s32.totalorder %s261, 8
        %s265 = scalar_select %p264, %s261, 8
        %s266 = smul.addr %s263, 9
        %s267 = sadd.s32 %s265, %s266
        %s268 = smul.addr %s267, 8
        %s269 = scalar_lea.vmem %s1, %s268
        %p270 = pneg %p82
        %p271 = pneg %p79
        %p272 = scmp.lt.s32.totalorder %s23, 1
        %s273 = scalar_select %p272, %s23, 1
        %p274 = scmp.lt.s32.totalorder %s24, 0
        %s275 = scalar_select %p274, %s24, 0
        %s276 = smul.addr %s275, 2
        %s277 = smul.addr %s273, 2
        %s278 = sadd.s32 %s276, %s277
        %s279 = smul.addr %s278, 8
        %s280 = scalar_lea.vmem %s2, %s279
        %p281 = pneg %p110
        %p282 = pneg %p107
        %p283 = pneg %p131
        %p284 = pneg %p128
        %p285 = pneg %p152
        %p286 = pneg %p149
        %p287 = pneg %p180
        %p288 = pneg %p177
        %s289 = sand.u32 %s167, 1
        %s290 = scalar_lea.sflag [#allocation3], %s289
        %s291 = sand.u32 %s167, 1
        %s292 = smul.addr %s291, 72
        %s293 = scalar_lea.vmem [#allocation2], %s292
        %s294 = smul.u32 9, %s24
        %p295 = scmp.lt.s32.totalorder %s23, 1
        %s296 = scalar_select %p295, %s23, 1
        %p297 = scmp.lt.s32.totalorder %s294, 8
        %s298 = scalar_select %p297, %s294, 8
        %s299 = smul.addr %s296, 9
        %s300 = sadd.s32 %s298, %s299
        %s301 = smul.addr %s300, 8
        %s302 = scalar_lea.vmem %s0, %s301
        %s303 = smul.u32 9, %s24
        %s304 = smul.u32 9, %s24
        %p305 = scmp.lt.s32.totalorder %s23, 1
        %s306 = scalar_select %p305, %s23, 1
        %p307 = scmp.lt.s32.totalorder %s304, 8
        %s308 = scalar_select %p307, %s304, 8
        %s309 = smul.addr %s306, 9
        %s310 = sadd.s32 %s308, %s309
        %s311 = smul.addr %s310, 8
        %s312 = scalar_lea.vmem %s1, %s311
        %s313 = smul.u32 9, %s24
        %p314 = scmp.lt.s32.totalorder %s23, 1
        %s315 = scalar_select %p314, %s23, 1
        %p316 = scmp.lt.s32.totalorder %s24, 0
        %s317 = scalar_select %p316, %s24, 0
        %s318 = smul.addr %s317, 2
        %s319 = smul.addr %s315, 2
        %s320 = sadd.s32 %s318, %s319
        %s321 = smul.addr %s320, 8
        %s322 = scalar_lea.vmem %s2, %s321
        %s323 = smul.u32 9, %s24
        %v324 = vld [vmem:[%s302] sm:$0xff]
        %v325 = vld [vmem:[%s302 + $0x8] sm:$0xff]
        %v326 = vld [vmem:[%s302 + $0x10] sm:$0xff]
        %v327 = vld [vmem:[%s302 + $0x18] sm:$0xff]
        %v328 = vld [vmem:[%s302 + $0x20] sm:$0xff]
        %v329 = vld [vmem:[%s302 + $0x28] sm:$0xff]
        %v330 = vld [vmem:[%s302 + $0x30] sm:$0xff]
        %v331 = vld [vmem:[%s302 + $0x38] sm:$0xff]
        %v332 = vld [vmem:[%s302 + $0x40] sm:$0xff]
        %v333 = vld [vmem:[%s312] sm:$0xff]
        %v334 = vld [vmem:[%s312 + $0x8] sm:$0xff]
        %v335 = vld [vmem:[%s312 + $0x10] sm:$0xff]
        %v336 = vld [vmem:[%s312 + $0x18] sm:$0xff]
        %v337 = vld [vmem:[%s312 + $0x20] sm:$0xff]
        %v338 = vld [vmem:[%s312 + $0x28] sm:$0xff]
        %v339 = vld [vmem:[%s312 + $0x30] sm:$0xff]
        %v340 = vld [vmem:[%s312 + $0x38] sm:$0xff]
        %v341 = vld [vmem:[%s312 + $0x40] sm:$0xff]
        %v342 = vld [vmem:[%s322] sm:$0xff]
        %v343 = vld [vmem:[%s322 + $0x8] sm:$0x1]
        %v344 = vld [vmem:[%s3] sm:$0xff]
        %vm354 = vcmask 1046528
        %v355 = vrot.slane %v324, 1
        %v356 = vrot.slane %v325, 1
        %v357 = vsel %vm354, %v355, %v356
        %v358 = vrot.slane %v326, 1
        %v359 = vsel %vm354, %v356, %v358
        %v360 = vrot.slane %v327, 1
        %v361 = vsel %vm354, %v358, %v360
        %v362 = vrot.slane %v328, 1
        %v363 = vsel %vm354, %v360, %v362
        %v364 = vrot.slane %v329, 1
        %v365 = vsel %vm354, %v362, %v364
        %v366 = vrot.slane %v330, 1
        %v367 = vsel %vm354, %v364, %v366
        %v368 = vrot.slane %v331, 1
        %v369 = vsel %vm354, %v366, %v368
        %v370 = vrot.slane %v332, 1
        %v371 = vsel %vm354, %v368, %v370
        %v374 = vsel %vm354, %v370, %v355
        %s375 = scalar_lea.vmem %s3, 8
        %v376 = vld [vmem:[%s375] sm:$0xff]
        %vm377 = vcmask 64512
        %v378 = vsel %vm377, %v357, 0
        %v380 = vsel %vm377, %v359, 0
        %v382 = vsel %vm377, %v361, 0
        %v384 = vsel %vm377, %v363, 0
        %v386 = vsel %vm377, %v365, 0
        %v388 = vsel %vm377, %v367, 0
        %v390 = vsel %vm377, %v369, 0
        %v392 = vsel %vm377, %v371, 0
        %v395 = vsel %vm377, %v374, 0
        %397 = vmatprep.subr.mxu0 0.0
        %398 = vmatpush1.msra.mxu0 %v376
        %399 = vmatprep.subr.mxu0 0.0
        %400 = vmatpush1.msra.mxu0 0.0
        %401 = vmatprep.subr.mxu0 0.0
        %402 = vmatpush1.msra.mxu0 0.0
        %403 = vmatprep.subr.mxu0 0.0
        %404 = vmatpush1.msra.mxu0 0.0
        %405 = vmatprep.subr.mxu0 0.0
        %406 = vmatpush1.msra.mxu0 0.0
        %407 = vmatprep.subr.mxu0 0.0
        %408 = vmatpush1.msra.mxu0 0.0
        %409 = vmatprep.subr.mxu0 0.0
        %410 = vmatpush1.msra.mxu0 0.0
        %411 = vmatprep.subr.mxu0 0.0
        %412 = vmatpush1.msra.mxu0 0.0
        %413 = vmatprep.subr.mxu0 0.0
        %414 = vmatpush1.msra.mxu0 0.0
        %415 = vmatprep.subr.mxu0 0.0
        %416 = vmatpush1.msra.mxu0 0.0
        %417 = vmatprep.subr.mxu0 0.0
        %418 = vmatpush1.msra.mxu0 0.0
        %419 = vmatprep.subr.mxu0 0.0
        %420 = vmatpush1.msra.mxu0 0.0
        %421 = vmatprep.subr.mxu0 0.0
        %422 = vmatpush1.msra.mxu0 0.0
        %423 = vmatprep.subr.mxu0 0.0
        %424 = vmatpush1.msra.mxu0 0.0
        %425 = vmatprep.subr.mxu0 0.0
        %426 = vmatpush1.msra.mxu0 0.0
        %427 = vmatprep.subr.mxu0 0.0
        %428 = vmatpush1.msra.mxu0 0.0
        %429 = vmatprep.subr.mxu0 0.0
        %430 = vmatpush1.msra.mxu0 0.0
        %431 = vmatprep.subr.mxu0 0.0
        %432 = vmatpush1.msra.mxu0 0.0
        %433 = vmatprep.subr.mxu0 0.0
        %434 = vmatpush1.msra.mxu0 0.0
        %435 = vmatprep.subr.mxu0 0.0
        %436 = vmatpush1.msra.mxu0 0.0
        %437 = vmatprep.subr.mxu0 0.0
        %438 = vmatpush1.msra.mxu0 0.0
        %439 = vmatprep.subr.mxu0 0.0
        %440 = vmatpush1.msra.mxu0 0.0
        %441 = vmatprep.subr.mxu0 0.0
        %442 = vmatpush1.msra.mxu0 0.0
        %443 = vmatprep.subr.mxu0 0.0
        %444 = vmatpush1.msra.mxu0 0.0
        %445 = vmatprep.subr.mxu0 0.0
        %446 = vmatpush1.msra.mxu0 0.0
        %447 = vmatprep.subr.mxu0 0.0
        %448 = vmatpush1.msra.mxu0 0.0
        %449 = vmatprep.subr.mxu0 0.0
        %450 = vmatpush1.msra.mxu0 0.0
        %451 = vmatprep.subr.mxu0 0.0
        %452 = vmatpush1.msra.mxu0 0.0
        %453 = vmatprep.subr.mxu0 0.0
        %454 = vmatpush1.msra.mxu0 0.0
        %455 = vmatprep.subr.mxu0 0.0
        %456 = vmatpush1.msra.mxu0 0.0
        %457 = vmatprep.subr.mxu0 0.0
        %458 = vmatpush1.msra.mxu0 0.0
        %459 = vmatprep.subr.mxu0 0.0
        %460 = vmatpush1.msra.mxu0 0.0
        %461 = vmatprep.mubr.f32.mxu0 0.0
        %462 = vmatmul.mubr.f32.gmra.mrb[0].mxu0 %v378
        %v463 = vpop.f32.mrb[0].mxu0
        %v464 = vadd.f32 0.0, %v463
        %v465 = vpop.f32.mrb[0].mxu0
        %466 = vmatprep.mubr.f32.mxu0 0.0
        %467 = vmatmul.mubr.f32.gmra.mrb[0].mxu0 %v380
        %v468 = vpop.f32.mrb[0].mxu0
        %v469 = vadd.f32 0.0, %v468
        %v470 = vpop.f32.mrb[0].mxu0
        %471 = vmatprep.mubr.f32.mxu0 0.0
        %472 = vmatmul.mubr.f32.gmra.mrb[0].mxu0 %v382
        %v473 = vpop.f32.mrb[0].mxu0
        %v474 = vadd.f32 0.0, %v473
        %v475 = vpop.f32.mrb[0].mxu0
        %476 = vmatprep.mubr.f32.mxu0 0.0
        %477 = vmatmul.mubr.f32.gmra.mrb[0].mxu0 %v384
        %v478 = vpop.f32.mrb[0].mxu0
        %v479 = vadd.f32 0.0, %v478
        %v480 = vpop.f32.mrb[0].mxu0
        %481 = vmatprep.mubr.f32.mxu0 0.0
        %482 = vmatmul.mubr.f32.gmra.mrb[0].mxu0 %v386
        %v483 = vpop.f32.mrb[0].mxu0
        %v484 = vadd.f32 0.0, %v483
        %v485 = vpop.f32.mrb[0].mxu0
        %486 = vmatprep.mubr.f32.mxu0 0.0
        %487 = vmatmul.mubr.f32.gmra.mrb[0].mxu0 %v388
        %v488 = vpop.f32.mrb[0].mxu0
        %v489 = vadd.f32 0.0, %v488
        %v490 = vpop.f32.mrb[0].mxu0
        %491 = vmatprep.mubr.f32.mxu0 0.0
        %492 = vmatmul.mubr.f32.gmra.mrb[0].mxu0 %v390
        %v493 = vpop.f32.mrb[0].mxu0
        %v494 = vadd.f32 0.0, %v493
        %v495 = vpop.f32.mrb[0].mxu0
        %496 = vmatprep.mubr.f32.mxu0 0.0
        %497 = vmatmul.mubr.f32.gmra.mrb[0].mxu0 %v392
        %v498 = vpop.f32.mrb[0].mxu0
        %v499 = vadd.f32 0.0, %v498
        %v500 = vpop.f32.mrb[0].mxu0
        %501 = vmatprep.mubr.f32.mxu0 0.0
        %502 = vmatmul.mubr.f32.gmra.mrb[0].mxu0 %v395
        %v503 = vpop.f32.mrb[0].mxu0
        %v504 = vadd.f32 0.0, %v503
        %v505 = vpop.f32.mrb[0].mxu0
        %506 = vdwg.mxu0
        %v507 = vsel %vm377, %v324, 0
        %v509 = vsel %vm377, %v325, 0
        %v511 = vsel %vm377, %v326, 0
        %v513 = vsel %vm377, %v327, 0
        %v515 = vsel %vm377, %v328, 0
        %v517 = vsel %vm377, %v329, 0
        %v519 = vsel %vm377, %v330, 0
        %v521 = vsel %vm377, %v331, 0
        %v523 = vsel %vm377, %v332, 0
        %525 = vmatprep.subr.mxu0 0.0
        %526 = vmatpush1.msra.mxu0 %v344
        %527 = vmatprep.subr.mxu0 0.0
        %528 = vmatpush1.msra.mxu0 0.0
        %529 = vmatprep.subr.mxu0 0.0
        %530 = vmatpush1.msra.mxu0 0.0
        %531 = vmatprep.subr.mxu0 0.0
        %532 = vmatpush1.msra.mxu0 0.0
        %533 = vmatprep.subr.mxu0 0.0
        %534 = vmatpush1.msra.mxu0 0.0
        %535 = vmatprep.subr.mxu0 0.0
        %536 = vmatpush1.msra.mxu0 0.0
        %537 = vmatprep.subr.mxu0 0.0
        %538 = vmatpush1.msra.mxu0 0.0
        %539 = vmatprep.subr.mxu0 0.0
        %540 = vmatpush1.msra.mxu0 0.0
        %541 = vmatprep.subr.mxu0 0.0
        %542 = vmatpush1.msra.mxu0 0.0
        %543 = vmatprep.subr.mxu0 0.0
        %544 = vmatpush1.msra.mxu0 0.0
        %545 = vmatprep.subr.mxu0 0.0
        %546 = vmatpush1.msra.mxu0 0.0
        %547 = vmatprep.subr.mxu0 0.0
        %548 = vmatpush1.msra.mxu0 0.0
        %549 = vmatprep.subr.mxu0 0.0
        %550 = vmatpush1.msra.mxu0 0.0
        %551 = vmatprep.subr.mxu0 0.0
        %552 = vmatpush1.msra.mxu0 0.0
        %553 = vmatprep.subr.mxu0 0.0
        %554 = vmatpush1.msra.mxu0 0.0
        %555 = vmatprep.subr.mxu0 0.0
        %556 = vmatpush1.msra.mxu0 0.0
        %557 = vmatprep.subr.mxu0 0.0
        %558 = vmatpush1.msra.mxu0 0.0
        %559 = vmatprep.subr.mxu0 0.0
        %560 = vmatpush1.msra.mxu0 0.0
        %561 = vmatprep.subr.mxu0 0.0
        %562 = vmatpush1.msra.mxu0 0.0
        %563 = vmatprep.subr.mxu0 0.0
        %564 = vmatpush1.msra.mxu0 0.0
        %565 = vmatprep.subr.mxu0 0.0
        %566 = vmatpush1.msra.mxu0 0.0
        %567 = vmatprep.subr.mxu0 0.0
        %568 = vmatpush1.msra.mxu0 0.0
        %569 = vmatprep.subr.mxu0 0.0
        %570 = vmatpush1.msra.mxu0 0.0
        %571 = vmatprep.subr.mxu0 0.0
        %572 = vmatpush1.msra.mxu0 0.0
        %573 = vmatprep.subr.mxu0 0.0
        %574 = vmatpush1.msra.mxu0 0.0
        %575 = vmatprep.subr.mxu0 0.0
        %576 = vmatpush1.msra.mxu0 0.0
        %577 = vmatprep.subr.mxu0 0.0
        %578 = vmatpush1.msra.mxu0 0.0
        %579 = vmatprep.subr.mxu0 0.0
        %580 = vmatpush1.msra.mxu0 0.0
        %581 = vmatprep.subr.mxu0 0.0
        %582 = vmatpush1.msra.mxu0 0.0
        %583 = vmatprep.subr.mxu0 0.0
        %584 = vmatpush1.msra.mxu0 0.0
        %585 = vmatprep.subr.mxu0 0.0
        %586 = vmatpush1.msra.mxu0 0.0
        %587 = vmatprep.subr.mxu0 0.0
        %588 = vmatpush1.msra.mxu0 0.0
        %589 = vmatprep.mubr.f32.mxu0 0.0
        %590 = vmatmul.mubr.f32.gmra.mrb[0].mxu0 %v507
        %v591 = vpop.f32.mrb[0].mxu0
        %v592 = vadd.f32 %v464, %v591
        %v593 = vpop.f32.mrb[0].mxu0
        %594 = vmatprep.mubr.f32.mxu0 0.0
        %595 = vmatmul.mubr.f32.gmra.mrb[0].mxu0 %v509
        %v596 = vpop.f32.mrb[0].mxu0
        %v597 = vadd.f32 %v469, %v596
        %v598 = vpop.f32.mrb[0].mxu0
        %599 = vmatprep.mubr.f32.mxu0 0.0
        %600 = vmatmul.mubr.f32.gmra.mrb[0].mxu0 %v511
        %v601 = vpop.f32.mrb[0].mxu0
        %v602 = vadd.f32 %v474, %v601
        %v603 = vpop.f32.mrb[0].mxu0
        %604 = vmatprep.mubr.f32.mxu0 0.0
        %605 = vmatmul.mubr.f32.gmra.mrb[0].mxu0 %v513
        %v606 = vpop.f32.mrb[0].mxu0
        %v607 = vadd.f32 %v479, %v606
        %v608 = vpop.f32.mrb[0].mxu0
        %609 = vmatprep.mubr.f32.mxu0 0.0
        %610 = vmatmul.mubr.f32.gmra.mrb[0].mxu0 %v515
        %v611 = vpop.f32.mrb[0].mxu0
        %v612 = vadd.f32 %v484, %v611
        %v613 = vpop.f32.mrb[0].mxu0
        %614 = vmatprep.mubr.f32.mxu0 0.0
        %615 = vmatmul.mubr.f32.gmra.mrb[0].mxu0 %v517
        %v616 = vpop.f32.mrb[0].mxu0
        %v617 = vadd.f32 %v489, %v616
        %v618 = vpop.f32.mrb[0].mxu0
        %619 = vmatprep.mubr.f32.mxu0 0.0
        %620 = vmatmul.mubr.f32.gmra.mrb[0].mxu0 %v519
        %v621 = vpop.f32.mrb[0].mxu0
        %v622 = vadd.f32 %v494, %v621
        %v623 = vpop.f32.mrb[0].mxu0
        %624 = vmatprep.mubr.f32.mxu0 0.0
        %625 = vmatmul.mubr.f32.gmra.mrb[0].mxu0 %v521
        %v626 = vpop.f32.mrb[0].mxu0
        %v627 = vadd.f32 %v499, %v626
        %v628 = vpop.f32.mrb[0].mxu0
        %629 = vmatprep.mubr.f32.mxu0 0.0
        %630 = vmatmul.mubr.f32.gmra.mrb[0].mxu0 %v523
        %v631 = vpop.f32.mrb[0].mxu0
        %v632 = vadd.f32 %v504, %v631
        %v633 = vpop.f32.mrb[0].mxu0
        %634 = vdwg.mxu0
        %s635 = scalar_lea.vmem %s3, 16
        %v636 = vld [vmem:[%s635] sm:$0xff]
        %v646 = vrot.slane %v333, 1
        %v647 = vrot.slane %v334, 1
        %v648 = vsel %vm354, %v646, %v647
        %v649 = vrot.slane %v335, 1
        %v650 = vsel %vm354, %v647, %v649
        %v651 = vrot.slane %v336, 1
        %v652 = vsel %vm354, %v649, %v651
        %v653 = vrot.slane %v337, 1
        %v654 = vsel %vm354, %v651, %v653
        %v655 = vrot.slane %v338, 1
        %v656 = vsel %vm354, %v653, %v655
        %v657 = vrot.slane %v339, 1
        %v658 = vsel %vm354, %v655, %v657
        %v659 = vrot.slane %v340, 1
        %v660 = vsel %vm354, %v657, %v659
        %v661 = vrot.slane %v341, 1
        %v662 = vsel %vm354, %v659, %v661
        %v665 = vsel %vm354, %v661, %v646
        %s666 = scalar_lea.vmem %s3, 24
        %v667 = vld [vmem:[%s666] sm:$0xff]
        %v668 = vsel %vm377, %v648, 0
        %v670 = vsel %vm377, %v650, 0
        %v672 = vsel %vm377, %v652, 0
        %v674 = vsel %vm377, %v654, 0
        %v676 = vsel %vm377, %v656, 0
        %v678 = vsel %vm377, %v658, 0
        %v680 = vsel %vm377, %v660, 0
        %v682 = vsel %vm377, %v662, 0
        %v685 = vsel %vm377, %v665, 0
        %687 = vmatprep.subr.mxu0 0.0
        %688 = vmatpush1.msra.mxu0 %v667
        %689 = vmatprep.subr.mxu0 0.0
        %690 = vmatpush1.msra.mxu0 0.0
        %691 = vmatprep.subr.mxu0 0.0
        %692 = vmatpush1.msra.mxu0 0.0
        %693 = vmatprep.subr.mxu0 0.0
        %694 = vmatpush1.msra.mxu0 0.0
        %695 = vmatprep.subr.mxu0 0.0
        %696 = vmatpush1.msra.mxu0 0.0
        %697 = vmatprep.subr.mxu0 0.0
        %698 = vmatpush1.msra.mxu0 0.0
        %699 = vmatprep.subr.mxu0 0.0
        %700 = vmatpush1.msra.mxu0 0.0
        %701 = vmatprep.subr.mxu0 0.0
        %702 = vmatpush1.msra.mxu0 0.0
        %703 = vmatprep.subr.mxu0 0.0
        %704 = vmatpush1.msra.mxu0 0.0
        %705 = vmatprep.subr.mxu0 0.0
        %706 = vmatpush1.msra.mxu0 0.0
        %707 = vmatprep.subr.mxu0 0.0
        %708 = vmatpush1.msra.mxu0 0.0
        %709 = vmatprep.subr.mxu0 0.0
        %710 = vmatpush1.msra.mxu0 0.0
        %711 = vmatprep.subr.mxu0 0.0
        %712 = vmatpush1.msra.mxu0 0.0
        %713 = vmatprep.subr.mxu0 0.0
        %714 = vmatpush1.msra.mxu0 0.0
        %715 = vmatprep.subr.mxu0 0.0
        %716 = vmatpush1.msra.mxu0 0.0
        %717 = vmatprep.subr.mxu0 0.0
        %718 = vmatpush1.msra.mxu0 0.0
        %719 = vmatprep.subr.mxu0 0.0
        %720 = vmatpush1.msra.mxu0 0.0
        %721 = vmatprep.subr.mxu0 0.0
        %722 = vmatpush1.msra.mxu0 0.0
        %723 = vmatprep.subr.mxu0 0.0
        %724 = vmatpush1.msra.mxu0 0.0
        %725 = vmatprep.subr.mxu0 0.0
        %726 = vmatpush1.msra.mxu0 0.0
        %727 = vmatprep.subr.mxu0 0.0
        %728 = vmatpush1.msra.mxu0 0.0
        %729 = vmatprep.subr.mxu0 0.0
        %730 = vmatpush1.msra.mxu0 0.0
        %731 = vmatprep.subr.mxu0 0.0
        %732 = vmatpush1.msra.mxu0 0.0
        %733 = vmatprep.subr.mxu0 0.0
        %734 = vmatpush1.msra.mxu0 0.0
        %735 = vmatprep.subr.mxu0 0.0
        %736 = vmatpush1.msra.mxu0 0.0
        %737 = vmatprep.subr.mxu0 0.0
        %738 = vmatpush1.msra.mxu0 0.0
        %739 = vmatprep.subr.mxu0 0.0
        %740 = vmatpush1.msra.mxu0 0.0
        %741 = vmatprep.subr.mxu0 0.0
        %742 = vmatpush1.msra.mxu0 0.0
        %743 = vmatprep.subr.mxu0 0.0
        %744 = vmatpush1.msra.mxu0 0.0
        %745 = vmatprep.subr.mxu0 0.0
        %746 = vmatpush1.msra.mxu0 0.0
        %747 = vmatprep.subr.mxu0 0.0
        %748 = vmatpush1.msra.mxu0 0.0
        %749 = vmatprep.subr.mxu0 0.0
        %750 = vmatpush1.msra.mxu0 0.0
        %751 = vmatprep.mubr.f32.mxu0 0.0
        %752 = vmatmul.mubr.f32.gmra.mrb[0].mxu0 %v668
        %v753 = vpop.f32.mrb[0].mxu0
        %v754 = vadd.f32 0.0, %v753
        %v755 = vpop.f32.mrb[0].mxu0
        %756 = vmatprep.mubr.f32.mxu0 0.0
        %757 = vmatmul.mubr.f32.gmra.mrb[0].mxu0 %v670
        %v758 = vpop.f32.mrb[0].mxu0
        %v759 = vadd.f32 0.0, %v758
        %v760 = vpop.f32.mrb[0].mxu0
        %761 = vmatprep.mubr.f32.mxu0 0.0
        %762 = vmatmul.mubr.f32.gmra.mrb[0].mxu0 %v672
        %v763 = vpop.f32.mrb[0].mxu0
        %v764 = vadd.f32 0.0, %v763
        %v765 = vpop.f32.mrb[0].mxu0
        %766 = vmatprep.mubr.f32.mxu0 0.0
        %767 = vmatmul.mubr.f32.gmra.mrb[0].mxu0 %v674
        %v768 = vpop.f32.mrb[0].mxu0
        %v769 = vadd.f32 0.0, %v768
        %v770 = vpop.f32.mrb[0].mxu0
        %771 = vmatprep.mubr.f32.mxu0 0.0
        %772 = vmatmul.mubr.f32.gmra.mrb[0].mxu0 %v676
        %v773 = vpop.f32.mrb[0].mxu0
        %v774 = vadd.f32 0.0, %v773
        %v775 = vpop.f32.mrb[0].mxu0
        %776 = vmatprep.mubr.f32.mxu0 0.0
        %777 = vmatmul.mubr.f32.gmra.mrb[0].mxu0 %v678
        %v778 = vpop.f32.mrb[0].mxu0
        %v779 = vadd.f32 0.0, %v778
        %v780 = vpop.f32.mrb[0].mxu0
        %781 = vmatprep.mubr.f32.mxu0 0.0
        %782 = vmatmul.mubr.f32.gmra.mrb[0].mxu0 %v680
        %v783 = vpop.f32.mrb[0].mxu0
        %v784 = vadd.f32 0.0, %v783
        %v785 = vpop.f32.mrb[0].mxu0
        %786 = vmatprep.mubr.f32.mxu0 0.0
        %787 = vmatmul.mubr.f32.gmra.mrb[0].mxu0 %v682
        %v788 = vpop.f32.mrb[0].mxu0
        %v789 = vadd.f32 0.0, %v788
        %v790 = vpop.f32.mrb[0].mxu0
        %791 = vmatprep.mubr.f32.mxu0 0.0
        %792 = vmatmul.mubr.f32.gmra.mrb[0].mxu0 %v685
        %v793 = vpop.f32.mrb[0].mxu0
        %v794 = vadd.f32 0.0, %v793
        %v795 = vpop.f32.mrb[0].mxu0
        %796 = vdwg.mxu0
        %v797 = vsel %vm377, %v333, 0
        %v799 = vsel %vm377, %v334, 0
        %v801 = vsel %vm377, %v335, 0
        %v803 = vsel %vm377, %v336, 0
        %v805 = vsel %vm377, %v337, 0
        %v807 = vsel %vm377, %v338, 0
        %v809 = vsel %vm377, %v339, 0
        %v811 = vsel %vm377, %v340, 0
        %v813 = vsel %vm377, %v341, 0
        %815 = vmatprep.subr.mxu0 0.0
        %816 = vmatpush1.msra.mxu0 %v636
        %817 = vmatprep.subr.mxu0 0.0
        %818 = vmatpush1.msra.mxu0 0.0
        %819 = vmatprep.subr.mxu0 0.0
        %820 = vmatpush1.msra.mxu0 0.0
        %821 = vmatprep.subr.mxu0 0.0
        %822 = vmatpush1.msra.mxu0 0.0
        %823 = vmatprep.subr.mxu0 0.0
        %824 = vmatpush1.msra.mxu0 0.0
        %825 = vmatprep.subr.mxu0 0.0
        %826 = vmatpush1.msra.mxu0 0.0
        %827 = vmatprep.subr.mxu0 0.0
        %828 = vmatpush1.msra.mxu0 0.0
        %829 = vmatprep.subr.mxu0 0.0
        %830 = vmatpush1.msra.mxu0 0.0
        %831 = vmatprep.subr.mxu0 0.0
        %832 = vmatpush1.msra.mxu0 0.0
        %833 = vmatprep.subr.mxu0 0.0
        %834 = vmatpush1.msra.mxu0 0.0
        %835 = vmatprep.subr.mxu0 0.0
        %836 = vmatpush1.msra.mxu0 0.0
        %837 = vmatprep.subr.mxu0 0.0
        %838 = vmatpush1.msra.mxu0 0.0
        %839 = vmatprep.subr.mxu0 0.0
        %840 = vmatpush1.msra.mxu0 0.0
        %841 = vmatprep.subr.mxu0 0.0
        %842 = vmatpush1.msra.mxu0 0.0
        %843 = vmatprep.subr.mxu0 0.0
        %844 = vmatpush1.msra.mxu0 0.0
        %845 = vmatprep.subr.mxu0 0.0
        %846 = vmatpush1.msra.mxu0 0.0
        %847 = vmatprep.subr.mxu0 0.0
        %848 = vmatpush1.msra.mxu0 0.0
        %849 = vmatprep.subr.mxu0 0.0
        %850 = vmatpush1.msra.mxu0 0.0
        %851 = vmatprep.subr.mxu0 0.0
        %852 = vmatpush1.msra.mxu0 0.0
        %853 = vmatprep.subr.mxu0 0.0
        %854 = vmatpush1.msra.mxu0 0.0
        %855 = vmatprep.subr.mxu0 0.0
        %856 = vmatpush1.msra.mxu0 0.0
        %857 = vmatprep.subr.mxu0 0.0
        %858 = vmatpush1.msra.mxu0 0.0
        %859 = vmatprep.subr.mxu0 0.0
        %860 = vmatpush1.msra.mxu0 0.0
        %861 = vmatprep.subr.mxu0 0.0
        %862 = vmatpush1.msra.mxu0 0.0
        %863 = vmatprep.subr.mxu0 0.0
        %864 = vmatpush1.msra.mxu0 0.0
        %865 = vmatprep.subr.mxu0 0.0
        %866 = vmatpush1.msra.mxu0 0.0
        %867 = vmatprep.subr.mxu0 0.0
        %868 = vmatpush1.msra.mxu0 0.0
        %869 = vmatprep.subr.mxu0 0.0
        %870 = vmatpush1.msra.mxu0 0.0
        %871 = vmatprep.subr.mxu0 0.0
        %872 = vmatpush1.msra.mxu0 0.0
        %873 = vmatprep.subr.mxu0 0.0
        %874 = vmatpush1.msra.mxu0 0.0
        %875 = vmatprep.subr.mxu0 0.0
        %876 = vmatpush1.msra.mxu0 0.0
        %877 = vmatprep.subr.mxu0 0.0
        %878 = vmatpush1.msra.mxu0 0.0
        %879 = vmatprep.mubr.f32.mxu0 0.0
        %880 = vmatmul.mubr.f32.gmra.mrb[0].mxu0 %v797
        %v881 = vpop.f32.mrb[0].mxu0
        %v882 = vadd.f32 %v754, %v881
        %v883 = vpop.f32.mrb[0].mxu0
        %884 = vmatprep.mubr.f32.mxu0 0.0
        %885 = vmatmul.mubr.f32.gmra.mrb[0].mxu0 %v799
        %v886 = vpop.f32.mrb[0].mxu0
        %v887 = vadd.f32 %v759, %v886
        %v888 = vpop.f32.mrb[0].mxu0
        %889 = vmatprep.mubr.f32.mxu0 0.0
        %890 = vmatmul.mubr.f32.gmra.mrb[0].mxu0 %v801
        %v891 = vpop.f32.mrb[0].mxu0
        %v892 = vadd.f32 %v764, %v891
        %v893 = vpop.f32.mrb[0].mxu0
        %894 = vmatprep.mubr.f32.mxu0 0.0
        %895 = vmatmul.mubr.f32.gmra.mrb[0].mxu0 %v803
        %v896 = vpop.f32.mrb[0].mxu0
        %v897 = vadd.f32 %v769, %v896
        %v898 = vpop.f32.mrb[0].mxu0
        %899 = vmatprep.mubr.f32.mxu0 0.0
        %900 = vmatmul.mubr.f32.gmra.mrb[0].mxu0 %v805
        %v901 = vpop.f32.mrb[0].mxu0
        %v902 = vadd.f32 %v774, %v901
        %v903 = vpop.f32.mrb[0].mxu0
        %904 = vmatprep.mubr.f32.mxu0 0.0
        %905 = vmatmul.mubr.f32.gmra.mrb[0].mxu0 %v807
        %v906 = vpop.f32.mrb[0].mxu0
        %v907 = vadd.f32 %v779, %v906
        %v908 = vpop.f32.mrb[0].mxu0
        %909 = vmatprep.mubr.f32.mxu0 0.0
        %910 = vmatmul.mubr.f32.gmra.mrb[0].mxu0 %v809
        %v911 = vpop.f32.mrb[0].mxu0
        %v912 = vadd.f32 %v784, %v911
        %v913 = vpop.f32.mrb[0].mxu0
        %914 = vmatprep.mubr.f32.mxu0 0.0
        %915 = vmatmul.mubr.f32.gmra.mrb[0].mxu0 %v811
        %v916 = vpop.f32.mrb[0].mxu0
        %v917 = vadd.f32 %v789, %v916
        %v918 = vpop.f32.mrb[0].mxu0
        %919 = vmatprep.mubr.f32.mxu0 0.0
        %920 = vmatmul.mubr.f32.gmra.mrb[0].mxu0 %v813
        %v921 = vpop.f32.mrb[0].mxu0
        %v922 = vadd.f32 %v794, %v921
        %v923 = vpop.f32.mrb[0].mxu0
        %924 = vdwg.mxu0
        %v925 = vadd.f32 %v592, %v882
        %v926 = vadd.f32 %v597, %v887
        %v927 = vadd.f32 %v602, %v892
        %v928 = vadd.f32 %v607, %v897
        %v929 = vadd.f32 %v612, %v902
        %v930 = vadd.f32 %v617, %v907
        %v931 = vadd.f32 %v622, %v912
        %v932 = vadd.f32 %v627, %v917
        %v933 = vadd.f32 %v632, %v922
        %v936 = vrot.slane %v342, 1
        %v937 = vrot.slane %v343, 1
        %v938 = vsel %vm354, %v936, %v937
        %v940 = vsel %vm354, %v370, %v936
        %s941 = scalar_lea.vmem %s3, 32
        %v942 = vld [vmem:[%s941] sm:$0xff]
        %v944 = vrot.slane %v359, 1
        %v945 = vrot.slane %v361, 1
        %v946 = vsel %vm354, %v944, %v945
        %v947 = vrot.slane %v363, 1
        %v948 = vsel %vm354, %v945, %v947
        %v949 = vrot.slane %v365, 1
        %v950 = vsel %vm354, %v947, %v949
        %v951 = vrot.slane %v367, 1
        %v952 = vsel %vm354, %v949, %v951
        %v953 = vrot.slane %v369, 1
        %v954 = vsel %vm354, %v951, %v953
        %v955 = vrot.slane %v371, 1
        %v956 = vsel %vm354, %v953, %v955
        %v957 = vrot.slane %v940, 1
        %v958 = vsel %vm354, %v955, %v957
        %v959 = vrot.slane %v938, 1
        %v960 = vsel %vm354, %v957, %v959
        %v963 = vsel %vm354, %v959, %v944
        %s964 = scalar_lea.vmem %s3, 40
        %v965 = vld [vmem:[%s964] sm:$0xff]
        %v966 = vsel %vm377, %v946, 0
        %v968 = vsel %vm377, %v948, 0
        %v970 = vsel %vm377, %v950, 0
        %v972 = vsel %vm377, %v952, 0
        %v974 = vsel %vm377, %v954, 0
        %v976 = vsel %vm377, %v956, 0
        %v978 = vsel %vm377, %v958, 0
        %v980 = vsel %vm377, %v960, 0
        %v983 = vsel %vm377, %v963, 0
        %985 = vmatprep.subr.mxu0 0.0
        %986 = vmatpush1.msra.mxu0 %v965
        %987 = vmatprep.subr.mxu0 0.0
        %988 = vmatpush1.msra.mxu0 0.0
        %989 = vmatprep.subr.mxu0 0.0
        %990 = vmatpush1.msra.mxu0 0.0
        %991 = vmatprep.subr.mxu0 0.0
        %992 = vmatpush1.msra.mxu0 0.0
        %993 = vmatprep.subr.mxu0 0.0
        %994 = vmatpush1.msra.mxu0 0.0
        %995 = vmatprep.subr.mxu0 0.0
        %996 = vmatpush1.msra.mxu0 0.0
        %997 = vmatprep.subr.mxu0 0.0
        %998 = vmatpush1.msra.mxu0 0.0
        %999 = vmatprep.subr.mxu0 0.0
        %1000 = vmatpush1.msra.mxu0 0.0
        %1001 = vmatprep.subr.mxu0 0.0
        %1002 = vmatpush1.msra.mxu0 0.0
        %1003 = vmatprep.subr.mxu0 0.0
        %1004 = vmatpush1.msra.mxu0 0.0
        %1005 = vmatprep.subr.mxu0 0.0
        %1006 = vmatpush1.msra.mxu0 0.0
        %1007 = vmatprep.subr.mxu0 0.0
        %1008 = vmatpush1.msra.mxu0 0.0
        %1009 = vmatprep.subr.mxu0 0.0
        %1010 = vmatpush1.msra.mxu0 0.0
        %1011 = vmatprep.subr.mxu0 0.0
        %1012 = vmatpush1.msra.mxu0 0.0
        %1013 = vmatprep.subr.mxu0 0.0
        %1014 = vmatpush1.msra.mxu0 0.0
        %1015 = vmatprep.subr.mxu0 0.0
        %1016 = vmatpush1.msra.mxu0 0.0
        %1017 = vmatprep.subr.mxu0 0.0
        %1018 = vmatpush1.msra.mxu0 0.0
        %1019 = vmatprep.subr.mxu0 0.0
        %1020 = vmatpush1.msra.mxu0 0.0
        %1021 = vmatprep.subr.mxu0 0.0
        %1022 = vmatpush1.msra.mxu0 0.0
        %1023 = vmatprep.subr.mxu0 0.0
        %1024 = vmatpush1.msra.mxu0 0.0
        %1025 = vmatprep.subr.mxu0 0.0
        %1026 = vmatpush1.msra.mxu0 0.0
        %1027 = vmatprep.subr.mxu0 0.0
        %1028 = vmatpush1.msra.mxu0 0.0
        %1029 = vmatprep.subr.mxu0 0.0
        %1030 = vmatpush1.msra.mxu0 0.0
        %1031 = vmatprep.subr.mxu0 0.0
        %1032 = vmatpush1.msra.mxu0 0.0
        %1033 = vmatprep.subr.mxu0 0.0
        %1034 = vmatpush1.msra.mxu0 0.0
        %1035 = vmatprep.subr.mxu0 0.0
        %1036 = vmatpush1.msra.mxu0 0.0
        %1037 = vmatprep.subr.mxu0 0.0
        %1038 = vmatpush1.msra.mxu0 0.0
        %1039 = vmatprep.subr.mxu0 0.0
        %1040 = vmatpush1.msra.mxu0 0.0
        %1041 = vmatprep.subr.mxu0 0.0
        %1042 = vmatpush1.msra.mxu0 0.0
        %1043 = vmatprep.subr.mxu0 0.0
        %1044 = vmatpush1.msra.mxu0 0.0
        %1045 = vmatprep.subr.mxu0 0.0
        %1046 = vmatpush1.msra.mxu0 0.0
        %1047 = vmatprep.subr.mxu0 0.0
        %1048 = vmatpush1.msra.mxu0 0.0
        %1049 = vmatprep.mubr.f32.mxu0 0.0
        %1050 = vmatmul.mubr.f32.gmra.mrb[0].mxu0 %v966
        %v1051 = vpop.f32.mrb[0].mxu0
        %v1052 = vadd.f32 0.0, %v1051
        %v1053 = vpop.f32.mrb[0].mxu0
        %1054 = vmatprep.mubr.f32.mxu0 0.0
        %1055 = vmatmul.mubr.f32.gmra.mrb[0].mxu0 %v968
        %v1056 = vpop.f32.mrb[0].mxu0
        %v1057 = vadd.f32 0.0, %v1056
        %v1058 = vpop.f32.mrb[0].mxu0
        %1059 = vmatprep.mubr.f32.mxu0 0.0
        %1060 = vmatmul.mubr.f32.gmra.mrb[0].mxu0 %v970
        %v1061 = vpop.f32.mrb[0].mxu0
        %v1062 = vadd.f32 0.0, %v1061
        %v1063 = vpop.f32.mrb[0].mxu0
        %1064 = vmatprep.mubr.f32.mxu0 0.0
        %1065 = vmatmul.mubr.f32.gmra.mrb[0].mxu0 %v972
        %v1066 = vpop.f32.mrb[0].mxu0
        %v1067 = vadd.f32 0.0, %v1066
        %v1068 = vpop.f32.mrb[0].mxu0
        %1069 = vmatprep.mubr.f32.mxu0 0.0
        %1070 = vmatmul.mubr.f32.gmra.mrb[0].mxu0 %v974
        %v1071 = vpop.f32.mrb[0].mxu0
        %v1072 = vadd.f32 0.0, %v1071
        %v1073 = vpop.f32.mrb[0].mxu0
        %1074 = vmatprep.mubr.f32.mxu0 0.0
        %1075 = vmatmul.mubr.f32.gmra.mrb[0].mxu0 %v976
        %v1076 = vpop.f32.mrb[0].mxu0
        %v1077 = vadd.f32 0.0, %v1076
        %v1078 = vpop.f32.mrb[0].mxu0
        %1079 = vmatprep.mubr.f32.mxu0 0.0
        %1080 = vmatmul.mubr.f32.gmra.mrb[0].mxu0 %v978
        %v1081 = vpop.f32.mrb[0].mxu0
        %v1082 = vadd.f32 0.0, %v1081
        %v1083 = vpop.f32.mrb[0].mxu0
        %1084 = vmatprep.mubr.f32.mxu0 0.0
        %1085 = vmatmul.mubr.f32.gmra.mrb[0].mxu0 %v980
        %v1086 = vpop.f32.mrb[0].mxu0
        %v1087 = vadd.f32 0.0, %v1086
        %v1088 = vpop.f32.mrb[0].mxu0
        %1089 = vmatprep.mubr.f32.mxu0 0.0
        %1090 = vmatmul.mubr.f32.gmra.mrb[0].mxu0 %v983
        %v1091 = vpop.f32.mrb[0].mxu0
        %v1092 = vadd.f32 0.0, %v1091
        %v1093 = vpop.f32.mrb[0].mxu0
        %1094 = vdwg.mxu0
        %v1095 = vsel %vm377, %v940, 0
        %v1097 = vsel %vm377, %v938, 0
        %1099 = vmatprep.subr.mxu0 0.0
        %1100 = vmatpush1.msra.mxu0 %v942
        %1101 = vmatprep.subr.mxu0 0.0
        %1102 = vmatpush1.msra.mxu0 0.0
        %1103 = vmatprep.subr.mxu0 0.0
        %1104 = vmatpush1.msra.mxu0 0.0
        %1105 = vmatprep.subr.mxu0 0.0
        %1106 = vmatpush1.msra.mxu0 0.0
        %1107 = vmatprep.subr.mxu0 0.0
        %1108 = vmatpush1.msra.mxu0 0.0
        %1109 = vmatprep.subr.mxu0 0.0
        %1110 = vmatpush1.msra.mxu0 0.0
        %1111 = vmatprep.subr.mxu0 0.0
        %1112 = vmatpush1.msra.mxu0 0.0
        %1113 = vmatprep.subr.mxu0 0.0
        %1114 = vmatpush1.msra.mxu0 0.0
        %1115 = vmatprep.subr.mxu0 0.0
        %1116 = vmatpush1.msra.mxu0 0.0
        %1117 = vmatprep.subr.mxu0 0.0
        %1118 = vmatpush1.msra.mxu0 0.0
        %1119 = vmatprep.subr.mxu0 0.0
        %1120 = vmatpush1.msra.mxu0 0.0
        %1121 = vmatprep.subr.mxu0 0.0
        %1122 = vmatpush1.msra.mxu0 0.0
        %1123 = vmatprep.subr.mxu0 0.0
        %1124 = vmatpush1.msra.mxu0 0.0
        %1125 = vmatprep.subr.mxu0 0.0
        %1126 = vmatpush1.msra.mxu0 0.0
        %1127 = vmatprep.subr.mxu0 0.0
        %1128 = vmatpush1.msra.mxu0 0.0
        %1129 = vmatprep.subr.mxu0 0.0
        %1130 = vmatpush1.msra.mxu0 0.0
        %1131 = vmatprep.subr.mxu0 0.0
        %1132 = vmatpush1.msra.mxu0 0.0
        %1133 = vmatprep.subr.mxu0 0.0
        %1134 = vmatpush1.msra.mxu0 0.0
        %1135 = vmatprep.subr.mxu0 0.0
        %1136 = vmatpush1.msra.mxu0 0.0
        %1137 = vmatprep.subr.mxu0 0.0
        %1138 = vmatpush1.msra.mxu0 0.0
        %1139 = vmatprep.subr.mxu0 0.0
        %1140 = vmatpush1.msra.mxu0 0.0
        %1141 = vmatprep.subr.mxu0 0.0
        %1142 = vmatpush1.msra.mxu0 0.0
        %1143 = vmatprep.subr.mxu0 0.0
        %1144 = vmatpush1.msra.mxu0 0.0
        %1145 = vmatprep.subr.mxu0 0.0
        %1146 = vmatpush1.msra.mxu0 0.0
        %1147 = vmatprep.subr.mxu0 0.0
        %1148 = vmatpush1.msra.mxu0 0.0
        %1149 = vmatprep.subr.mxu0 0.0
        %1150 = vmatpush1.msra.mxu0 0.0
        %1151 = vmatprep.subr.mxu0 0.0
        %1152 = vmatpush1.msra.mxu0 0.0
        %1153 = vmatprep.subr.mxu0 0.0
        %1154 = vmatpush1.msra.mxu0 0.0
        %1155 = vmatprep.subr.mxu0 0.0
        %1156 = vmatpush1.msra.mxu0 0.0
        %1157 = vmatprep.subr.mxu0 0.0
        %1158 = vmatpush1.msra.mxu0 0.0
        %1159 = vmatprep.subr.mxu0 0.0
        %1160 = vmatpush1.msra.mxu0 0.0
        %1161 = vmatprep.subr.mxu0 0.0
        %1162 = vmatpush1.msra.mxu0 0.0
        %1163 = vmatprep.mubr.f32.mxu0 0.0
        %1164 = vmatmul.mubr.f32.gmra.mrb[0].mxu0 %v380
        %v1165 = vpop.f32.mrb[0].mxu0
        %v1166 = vadd.f32 %v1052, %v1165
        %v1167 = vpop.f32.mrb[0].mxu0
        %1168 = vmatprep.mubr.f32.mxu0 0.0
        %1169 = vmatmul.mubr.f32.gmra.mrb[0].mxu0 %v382
        %v1170 = vpop.f32.mrb[0].mxu0
        %v1171 = vadd.f32 %v1057, %v1170
        %v1172 = vpop.f32.mrb[0].mxu0
        %1173 = vmatprep.mubr.f32.mxu0 0.0
        %1174 = vmatmul.mubr.f32.gmra.mrb[0].mxu0 %v384
        %v1175 = vpop.f32.mrb[0].mxu0
        %v1176 = vadd.f32 %v1062, %v1175
        %v1177 = vpop.f32.mrb[0].mxu0
        %1178 = vmatprep.mubr.f32.mxu0 0.0
        %1179 = vmatmul.mubr.f32.gmra.mrb[0].mxu0 %v386
        %v1180 = vpop.f32.mrb[0].mxu0
        %v1181 = vadd.f32 %v1067, %v1180
        %v1182 = vpop.f32.mrb[0].mxu0
        %1183 = vmatprep.mubr.f32.mxu0 0.0
        %1184 = vmatmul.mubr.f32.gmra.mrb[0].mxu0 %v388
        %v1185 = vpop.f32.mrb[0].mxu0
        %v1186 = vadd.f32 %v1072, %v1185
        %v1187 = vpop.f32.mrb[0].mxu0
        %1188 = vmatprep.mubr.f32.mxu0 0.0
        %1189 = vmatmul.mubr.f32.gmra.mrb[0].mxu0 %v390
        %v1190 = vpop.f32.mrb[0].mxu0
        %v1191 = vadd.f32 %v1077, %v1190
        %v1192 = vpop.f32.mrb[0].mxu0
        %1193 = vmatprep.mubr.f32.mxu0 0.0
        %1194 = vmatmul.mubr.f32.gmra.mrb[0].mxu0 %v392
        %v1195 = vpop.f32.mrb[0].mxu0
        %v1196 = vadd.f32 %v1082, %v1195
        %v1197 = vpop.f32.mrb[0].mxu0
        %1198 = vmatprep.mubr.f32.mxu0 0.0
        %1199 = vmatmul.mubr.f32.gmra.mrb[0].mxu0 %v1095
        %v1200 = vpop.f32.mrb[0].mxu0
        %v1201 = vadd.f32 %v1087, %v1200
        %v1202 = vpop.f32.mrb[0].mxu0
        %1203 = vmatprep.mubr.f32.mxu0 0.0
        %1204 = vmatmul.mubr.f32.gmra.mrb[0].mxu0 %v1097
        %v1205 = vpop.f32.mrb[0].mxu0
        %v1206 = vadd.f32 %v1092, %v1205
        %v1207 = vpop.f32.mrb[0].mxu0
        %1208 = vdwg.mxu0
        %v1209 = vadd.f32 %v925, %v1166
        %v1210 = vadd.f32 %v926, %v1171
        %v1211 = vadd.f32 %v927, %v1176
        %v1212 = vadd.f32 %v928, %v1181
        %v1213 = vadd.f32 %v929, %v1186
        %v1214 = vadd.f32 %v930, %v1191
        %v1215 = vadd.f32 %v931, %v1196
        %v1216 = vadd.f32 %v932, %v1201
        %v1217 = vadd.f32 %v933, %v1206
        %v1218 = vld [vmem:[%s4] sm:$0x1]
        %v1220 = vlaneseq
        %v1221 = vshrl.u32 %v1220, 7
        %v1222 = vsub.s32 0, %v1221
        %v1223 = vrot.slane %v1218, %v1222
        %v1225 = vadd.f32 %v1209, %v1223
        %v1226 = vadd.f32 %v1210, %v1223
        %v1227 = vadd.f32 %v1211, %v1223
        %v1228 = vadd.f32 %v1212, %v1223
        %v1229 = vadd.f32 %v1213, %v1223
        %v1230 = vadd.f32 %v1214, %v1223
        %v1231 = vadd.f32 %v1215, %v1223
        %v1232 = vadd.f32 %v1216, %v1223
        %v1233 = vadd.f32 %v1217, %v1223
        %1234 = vst [vmem:[%s293] sm:$0xff] %v1225
        %1235 = vst [vmem:[%s293 + $0x8] sm:$0xff] %v1226
        %1236 = vst [vmem:[%s293 + $0x10] sm:$0xff] %v1227
        %1237 = vst [vmem:[%s293 + $0x18] sm:$0xff] %v1228
        %1238 = vst [vmem:[%s293 + $0x20] sm:$0xff] %v1229
        %1239 = vst [vmem:[%s293 + $0x28] sm:$0xff] %v1230
        %1240 = vst [vmem:[%s293 + $0x30] sm:$0xff] %v1231
        %1241 = vst [vmem:[%s293 + $0x38] sm:$0xff] %v1232
        %1242 = vst [vmem:[%s293 + $0x40] sm:$0xff] %v1233
        %s1243 = sand.u32 %s167, 1
        %s1244 = scalar_lea.sflag [#allocation3], %s1243
        %s1245 = sand.u32 %s167, 1
        %s1246 = smul.addr %s1245, 72
        %s1247 = scalar_lea.vmem [#allocation2], %s1246
        // Predicated region
        $region41: #{tpu_custom_call.1} parent=39 // pred_check
          %p1248 = pneg %p177
        $region42: #{tpu_custom_call.1} parent=39 // pred_check_branch
          %1250 = sbr.rel (%p1248) target = $region44
        $region43: #{tpu_custom_call.1} parent=39 // pred_region
          %s1251 = smul.u32 9, %s24
          %s1253 = ssub.s32 1152, 1152
          %1254 = vsyncadd %s1244, %s1253
          %s1255 = smul.addr %s23, 9
          %s1256 = sadd.s32 %s1251, %s1255
          %s1257 = smul.addr %s1256, 128
          %s1258 = scalar_lea.hbm %s5, %s1257
          %s1259 = sshll.u32 %s1247, 4
          %s1260 = int_to_ptr.vmem [resolvable:$true] %s1259
          %1265 = dma.vmem_to_hbm [thread:$0]  %s1260, 1152, %s1258, %s1244, 128, 128, 8
        $region44: #{tpu_custom_call.1} parent=39 // pred_fallthru
          _
      $region40: #{tpu_custom_call.1} parent=5 // pred_fallthru
        _
      %p1266 = scmp.le.s32.totalorder 2, %s14
      // Predicated region
      $region45: #{tpu_custom_call.1} parent=5 // pred_check
        %p1267 = pneg %p1266
      $region46: #{tpu_custom_call.1} parent=5 // pred_check_branch
        %1269 = sbr.rel (%p1267) target = $region48
      $region47: #{tpu_custom_call.1} parent=5 // pred_region
        %s1270 = ssub.s32 %s14, 2
        // Predicated region
        $region49: #{tpu_custom_call.1} parent=47 // pred_check
          %p1271 = pneg %p183
        $region50: #{tpu_custom_call.1} parent=47 // pred_check_branch
          %1273 = sbr.rel (%p1271) target = $region52
        $region51: #{tpu_custom_call.1} parent=47 // pred_region
          %s1274 = sand.u32 %s168, 1
          %s1275 = scalar_lea.sflag [#allocation3], %s1274
          %s1276 = sand.u32 %s168, 1
          %s1277 = smul.addr %s1276, 72
          %s1278 = scalar_lea.vmem [#allocation2], %s1277
          %1279 = dma.done %s1275, 1152
        $region52: #{tpu_custom_call.1} parent=47 // pred_fallthru
          _
      $region48: #{tpu_custom_call.1} parent=5 // pred_fallthru
        _
    $region6: #{tpu_custom_call.1} parent=1 // loop_footer
      %s18 = sadd.s32 1, %s14
    $region7: #{tpu_custom_call.1} parent=1 // loop_footer_branch
      %13 = sbr.rel target = $region3
    $region8: #{tpu_custom_call.1} parent=1 // loop_exit
      _
    %1280 = vsyncpa [#allocation3], 1
    %s1281 = scalar_lea.sflag [#allocation3], 1
    %1282 = vsyncpa %s1281, 1

</llo_original>
